<compile_context>
chip_gen: v7x
topology: tpu7x:2x2x1
jax: 0.10.0
libtpu: 0.0.40
codegen_flags: <defaults>
</compile_context>

<pallas_src>
import functools
import math

import jax
import jax.numpy as jnp
from jax.experimental import pallas as pl
from jax.experimental.pallas import tpu as pltpu


def make_icnn_kernel(out_dims, compute_dtype):
    """out_dims = (l1, l2, ..., l_out): output width of each of the L layers."""
    L = len(out_dims)
    offs = []
    o = 0
    for d in out_dims:
        offs.append(o)
        o += d
    cast_z = jnp.dtype(compute_dtype) != jnp.dtype(jnp.float32)

    def kernel(xT_ref, w_all_ref, b_all_ref, *rest):
        u_refs = rest[:-1]          # L-1 refs: softplus(U_l)/n, precomputed
        out_ref = rest[-1]          # (d_out, block_b)  f32

        xT = xT_ref[...]            # (d0, block_b)  compute_dtype

        # Single MXU push for every batch-invariant W_l @ x^T (+ bias add done
        # once, off the serial per-layer chain).
        wx = jnp.dot(w_all_ref[...], xT, preferred_element_type=jnp.float32)
        wx = wx + b_all_ref[...]    # (sum_l, block_b) f32

        # Layer 0: z = relu(W0 x + b0)  (no relu if the net is a single layer).
        z0 = wx[offs[0]:offs[0] + out_dims[0], :]
        z = jnp.maximum(z0, 0.0) if L > 1 else z0

        # Remaining layers: only the data-dependent U_l @ z dot is on the chain.
        for layer in range(1, L):
            u = u_refs[layer - 1][...]                  # (l, l_prev)
            zin = z.astype(compute_dtype) if cast_z else z
            y = wx[offs[layer]:offs[layer] + out_dims[layer], :] + jnp.dot(
                u, zin, preferred_element_type=jnp.float32)
            z = jnp.maximum(y, 0.0) if layer < L - 1 else y

        out_ref[...] = z.astype(out_ref.dtype)

    return kernel


@functools.partial(jax.jit, static_argnames=("block_b", "compute_dtype"))
def icnn_forward(x, Ws, bs, Us, *, block_b=512, compute_dtype=jnp.float32):
    """Forward pass matching ICNN.forward.  x: (B, d0).  Returns (B, d_out)."""
    B, d0 = x.shape
    L = len(Ws)
    out_dims = tuple(int(W.shape[0]) for W in Ws)
    d_out = out_dims[-1]

    # --- lane-dense batch tiling: always pad the batch to a multiple of 128 ---
    bb = int(block_b)
    assert bb % 128 == 0, "block_b must be a multiple of 128"
    Bp128 = pl.cdiv(B, 128) * 128
    if Bp128 < bb:
        bb = Bp128                      # small batch: one lane-dense tile
    Bp = pl.cdiv(B, bb) * bb
    x_p = jnp.pad(x, ((0, Bp - B), (0, 0))) if Bp != B else x
    xT = jnp.transpose(x_p).astype(compute_dtype)          # (d0, Bp)

    # --- batch-invariant weight preprocessing (once, fused into this jit) ---
    w_all = jnp.concatenate(list(Ws), axis=0).astype(compute_dtype)      # (sum_l, d0)
    b_all = jnp.concatenate([b.reshape(-1) for b in bs], axis=0)
    b_all = b_all.reshape(-1, 1).astype(jnp.float32)                     # (sum_l, 1)
    u_proc = [(jax.nn.softplus(U) / U.shape[0]).astype(compute_dtype) for U in Us]

    inputs = [xT, w_all, b_all, *u_proc]
    in_specs = [pl.BlockSpec((d0, bb), lambda i: (0, i))]
    for a in inputs[1:]:
        # Constant across the grid (index_map always (0, 0)) -> fetched once.
        # TODO(synk): on v7x with large hidden dims, single-buffer these
        # (pipeline_mode=pl.Buffered(1)) or stream weights per layer with
        # pltpu.emit_pipeline; unnecessary at these sizes.
        in_specs.append(pl.BlockSpec(a.shape, lambda i: (0, 0)))

    out_spec = pl.BlockSpec((d_out, bb), lambda i: (0, i))
    out_shape = jax.ShapeDtypeStruct((d_out, Bp), jnp.float32)

    # --- VMEM budget (generation-aware cap) ---
    weight_bytes = sum(int(a.size) * a.dtype.itemsize for a in inputs[1:])
    tile_bytes = (d0 * bb * jnp.dtype(compute_dtype).itemsize) + (d_out * bb * 4)
    wx_bytes = sum(out_dims) * bb * 4           # resident Wx_all slab
    est = 2 * (weight_bytes + tile_bytes) + wx_bytes + (2 << 20)
    try:
        vmem_cap = int(pltpu.get_tpu_info().vmem_capacity_bytes)
    except Exception:
        vmem_cap = 64 << 20                     # assume smallest (v7x per-TC)
    ceiling = (vmem_cap * 5) // 8               # ~40 MiB v7x, ~80 MiB v5e/v6e
    vmem_limit = int(min(max(est, 16 << 20), ceiling))

    flops = 2 * Bp * (sum(int(W.size) for W in Ws) + sum(int(U.size) for U in Us))
    bytes_accessed = (int(xT.size) * xT.dtype.itemsize
                      + weight_bytes + d_out * Bp * 4)
    cost = pl.CostEstimate(flops=int(flops), transcendentals=0,
                           bytes_accessed=int(bytes_accessed))

    out_t = pl.pallas_call(
        make_icnn_kernel(out_dims, compute_dtype),
        out_shape=out_shape,
        grid=(Bp // bb,),
        in_specs=in_specs,
        out_specs=out_spec,
        compiler_params=pltpu.CompilerParams(
            dimension_semantics=("parallel",),
            vmem_limit_bytes=vmem_limit),
        cost_estimate=cost,
    )(*inputs)

    return jnp.transpose(out_t)[:B].astype(x.dtype)          # (B, d_out)


def icnn_reference(x, Ws, bs, Us):
    """Pure-JAX reference matching the PyTorch forward exactly."""
    z = jnp.maximum(x @ Ws[0].T + bs[0], 0.0)
    for W, b, U in zip(Ws[1:-1], bs[1:-1], Us[:-1]):
        z = x @ W.T + b + (z @ jax.nn.softplus(U).T) / U.shape[0]
        z = jnp.maximum(z, 0.0)
    return x @ Ws[-1].T + bs[-1] + (z @ jax.nn.softplus(Us[-1]).T) / Us[-1].shape[0]


def init_icnn_params(key, layer_sizes):
    """Deterministic init mirroring ICNN.reset_parameters()."""
    d0 = layer_sizes[0]
    Ws, bs, Us = [], [], []
    for l in layer_sizes[1:]:
        key, kw = jax.random.split(key)
        wb = 1.0 / math.sqrt(d0)          # kaiming_uniform_(a=sqrt(5)) bound
        Ws.append(jax.random.uniform(kw, (l, d0), jnp.float32, -wb, wb))
        key, kb = jax.random.split(key)
        bb_ = 1.0 / math.sqrt(d0)
        bs.append(jax.random.uniform(kb, (l,), jnp.float32, -bb_, bb_))
    for i in range(1, len(layer_sizes) - 1):
        key, ku = jax.random.split(key)
        ub = 1.0 / math.sqrt(layer_sizes[i])
        Us.append(jax.random.uniform(
            ku, (layer_sizes[i + 1], layer_sizes[i]), jnp.float32, -ub, ub))
    return Ws, bs, Us


if __name__ == "__main__":
    layer_sizes = [16, 64, 64, 1]     # d0=16 input features, scalar ICNN output
    batch = 1000                      # ragged on purpose: padded to 1024 -> 4 tiles
                                      # of 256 (>= 2 grid steps per v7x TensorCore)

    key = jax.random.PRNGKey(0)
    key, kx = jax.random.split(key)
    x = jax.random.normal(kx, (batch, layer_sizes[0]), jnp.float32)
    Ws, bs, Us = init_icnn_params(key, layer_sizes)

    ref = icnn_reference(x, Ws, bs, Us)

    # f32 path (default; best for v5e and for these narrow hidden dims anywhere).
    out = icnn_forward(x, Ws, bs, Us, block_b=256)
    out = jax.block_until_ready(out)
    assert out.shape == (batch, layer_sizes[-1])
    assert jnp.allclose(out, ref, atol=1e-4, rtol=1e-4), (
        f"max abs err {jnp.max(jnp.abs(out - ref))}")

    # Optional bf16-operand path (worthwhile only for wide hidden dims on
    # v6e/v7x); f32 accumulation, loose tolerance since x itself is cast.
    out_bf16 = icnn_forward(x, Ws, bs, Us, block_b=256, compute_dtype=jnp.bfloat16)
    out_bf16 = jax.block_until_ready(out_bf16)
    assert out_bf16.shape == (batch, layer_sizes[-1])
    assert jnp.allclose(out_bf16, ref, atol=1e-1, rtol=1e-1), (
        f"bf16 max abs err {jnp.max(jnp.abs(out_bf16 - ref))}")

    print("KERNEL_OK")
</pallas_src>

<mosaic_0001>
module attributes {stable_mosaic.version = 11 : i64} {
  func.func @kernel(%arg0: i32, %arg1: memref<16x256xf32, #tpu.memory_space<vmem>>, %arg2: memref<129x16xf32, #tpu.memory_space<vmem>>, %arg3: memref<129x1xf32, #tpu.memory_space<vmem>>, %arg4: memref<64x64xf32, #tpu.memory_space<vmem>>, %arg5: memref<1x64xf32, #tpu.memory_space<vmem>>, %arg6: memref<1x256xf32, #tpu.memory_space<vmem>>) attributes {dimension_semantics = [#tpu.dimension_semantics<parallel>], iteration_bounds = array<i64: 4>, scalar_prefetch = 0 : i64, scratch_operands = 0 : i64, tpu.core_type = #tpu.core_type<tc>, window_params = [{transform_indices = @transform_0, window_bounds = array<i64: 16, 256>}, {pipeline_mode = #tpu.pipeline_mode<synchronous>, transform_indices = @transform_1, window_bounds = array<i64: 129, 16>}, {pipeline_mode = #tpu.pipeline_mode<synchronous>, transform_indices = @transform_2, window_bounds = array<i64: 129, 1>}, {pipeline_mode = #tpu.pipeline_mode<synchronous>, transform_indices = @transform_3, window_bounds = array<i64: 64, 64>}, {pipeline_mode = #tpu.pipeline_mode<synchronous>, transform_indices = @transform_4, window_bounds = array<i64: 1, 64>}, {transform_indices = @transform_5, window_bounds = array<i64: 1, 256>}]} {
    %c0 = arith.constant 0 : index
    %c0_0 = arith.constant 0 : index
    %0 = vector.load %arg1[%c0, %c0_0] : memref<16x256xf32, #tpu.memory_space<vmem>>, vector<16x256xf32>
    %c0_1 = arith.constant 0 : index
    %c0_2 = arith.constant 0 : index
    %1 = vector.load %arg2[%c0_1, %c0_2] : memref<129x16xf32, #tpu.memory_space<vmem>>, vector<129x16xf32>
    %cst = arith.constant dense<0.000000e+00> : vector<129x256xf32>
    %2 = tpu.matmul %1, %0, %cst {dimension_numbers = #tpu.dot_dimension_numbers<[1], [0], [0], [1], [0, 0, 1, 1], [], []>} : vector<129x16xf32>, vector<16x256xf32>, vector<129x256xf32> -> vector<129x256xf32>
    %c0_3 = arith.constant 0 : index
    %c0_4 = arith.constant 0 : index
    %3 = vector.load %arg3[%c0_3, %c0_4] : memref<129x1xf32, #tpu.memory_space<vmem>>, vector<129x1xf32>
    %4 = vector.broadcast %3 : vector<129x1xf32> to vector<129x256xf32>
    %5 = arith.addf %2, %4 : vector<129x256xf32>
    %6 = vector.extract_strided_slice %5 {offsets = [0, 0], sizes = [64, 256], strides = [1, 1]} : vector<129x256xf32> to vector<64x256xf32>
    %cst_5 = arith.constant 0.000000e+00 : f32
    %7 = vector.broadcast %cst_5 : f32 to vector<64x256xf32>
    %8 = arith.maximumf %6, %7 : vector<64x256xf32>
    %c0_6 = arith.constant 0 : index
    %c0_7 = arith.constant 0 : index
    %9 = vector.load %arg4[%c0_6, %c0_7] : memref<64x64xf32, #tpu.memory_space<vmem>>, vector<64x64xf32>
    %10 = vector.extract_strided_slice %5 {offsets = [64, 0], sizes = [64, 256], strides = [1, 1]} : vector<129x256xf32> to vector<64x256xf32>
    %cst_8 = arith.constant dense<0.000000e+00> : vector<64x256xf32>
    %11 = tpu.matmul %9, %8, %cst_8 {dimension_numbers = #tpu.dot_dimension_numbers<[1], [0], [0], [1], [0, 0, 1, 1], [], []>} : vector<64x64xf32>, vector<64x256xf32>, vector<64x256xf32> -> vector<64x256xf32>
    %12 = arith.addf %10, %11 : vector<64x256xf32>
    %cst_9 = arith.constant 0.000000e+00 : f32
    %13 = vector.broadcast %cst_9 : f32 to vector<64x256xf32>
    %14 = arith.maximumf %12, %13 : vector<64x256xf32>
    %c0_10 = arith.constant 0 : index
    %c0_11 = arith.constant 0 : index
    %15 = vector.load %arg5[%c0_10, %c0_11] : memref<1x64xf32, #tpu.memory_space<vmem>>, vector<1x64xf32>
    %16 = vector.extract_strided_slice %5 {offsets = [128, 0], sizes = [1, 256], strides = [1, 1]} : vector<129x256xf32> to vector<1x256xf32>
    %cst_12 = arith.constant dense<0.000000e+00> : vector<1x256xf32>
    %17 = tpu.matmul %15, %14, %cst_12 {dimension_numbers = #tpu.dot_dimension_numbers<[1], [0], [0], [1], [0, 0, 1, 1], [], []>} : vector<1x64xf32>, vector<64x256xf32>, vector<1x256xf32> -> vector<1x256xf32>
    %18 = arith.addf %16, %17 : vector<1x256xf32>
    %c0_13 = arith.constant 0 : index
    %c0_14 = arith.constant 0 : index
    %19 = vector.load %arg6[%c0_13, %c0_14] : memref<1x256xf32, #tpu.memory_space<vmem>>, vector<1x256xf32>
    tpu.vector_store %arg6[%c0_13, %c0_14], %18 {strides = array<i32>} : memref<1x256xf32, #tpu.memory_space<vmem>>, vector<1x256xf32>,
    return
  }
  func.func @transform_0(%arg0: i32) -> (i32, i32) {
    %c0_i32 = arith.constant 0 : i32
    %c0_i32_0 = arith.constant 0 : i32
    return %c0_i32, %arg0 : i32, i32
  }
  func.func @transform_1(%arg0: i32) -> (i32, i32) {
    %c0_i32 = arith.constant 0 : i32
    %c0_i32_0 = arith.constant 0 : i32
    %c0_i32_1 = arith.constant 0 : i32
    return %c0_i32, %c0_i32_0 : i32, i32
  }
  func.func @transform_2(%arg0: i32) -> (i32, i32) {
    %c0_i32 = arith.constant 0 : i32
    %c0_i32_0 = arith.constant 0 : i32
    %c0_i32_1 = arith.constant 0 : i32
    return %c0_i32, %c0_i32_0 : i32, i32
  }
  func.func @transform_3(%arg0: i32) -> (i32, i32) {
    %c0_i32 = arith.constant 0 : i32
    %c0_i32_0 = arith.constant 0 : i32
    %c0_i32_1 = arith.constant 0 : i32
    return %c0_i32, %c0_i32_0 : i32, i32
  }
  func.func @transform_4(%arg0: i32) -> (i32, i32) {
    %c0_i32 = arith.constant 0 : i32
    %c0_i32_0 = arith.constant 0 : i32
    %c0_i32_1 = arith.constant 0 : i32
    return %c0_i32, %c0_i32_0 : i32, i32
  }
  func.func @transform_5(%arg0: i32) -> (i32, i32) {
    %c0_i32 = arith.constant 0 : i32
    %c0_i32_0 = arith.constant 0 : i32
    return %c0_i32, %arg0 : i32, i32
  }
}

</mosaic_0001>

<llo_original>
// kernel: icnn_forward.1
$region0: #{icnn_forward.1}
  #allocation0 [shape = 'u32[]', space=smem, size = 0x4, offset = 0x4, fixed_abs, tag = 'smem constant byte address 0x4 - core index']
  #allocation1 [shape = 'u32[144,128]{1,0:T(1,128)}', space=vmem, size = 0x12000, scoped, tag = 'internal scratch']
  %s0 = inlined_call_operand.vmem [shape: f32[16,1024], index: 0, kind: input, shape index: {}]
  %s1 = inlined_call_operand.vmem [shape: f32[129,16], index: 1, kind: input, shape index: {}]
  %s2 = inlined_call_operand.vmem [shape: f32[129,1], index: 2, kind: input, shape index: {}]
  %s3 = inlined_call_operand.vmem [shape: f32[64,64], index: 3, kind: input, shape index: {}]
  %s4 = inlined_call_operand.vmem [shape: f32[1,64], index: 4, kind: input, shape index: {}]
  %s5 = inlined_call_operand.vmem [shape: f32[1,1024], index: 5, kind: output, shape index: {}]
  %s6 = sld [smem:[#allocation0]]
  $region76: #{icnn_forward.1} parent=0
    _
  %s8 = ssub.s32 1, %s6
  %s9 = scalar_select 0, %s8, %s6
  $region1: #{icnn_forward.1} parent=0
    #allocation2 [shape = 'u8[32768]{0}', space=vmem, size = 0x8000, scoped, tag = 'input window, operand 0']
    loop: start=0, step=1, limit=6
    $region2: #{icnn_forward.1} parent=1 // loop_pre_header
      _
    $region3: #{icnn_forward.1} parent=1 // loop_header
      %s11 = sphi 0, %s15
      %p12 = scmp.ge.s32.totalorder %s11, 6
      %s21 = sphi 0, %s23
      %s24 = sphi 0, %s21
      %s25 = sphi 0, %s24
      %s41 = sphi 0, %s25
      %s45 = sphi 0, %s45
      %s47 = sphi 0, %s45
      %s48 = sphi 0, %s47
      %s62 = sphi 0, %s48
      %s66 = sphi 0, %s66
      %s68 = sphi 0, %s66
      %s69 = sphi 0, %s68
      %s83 = sphi 0, %s69
      %s87 = sphi 0, %s87
      %s89 = sphi 0, %s87
      %s90 = sphi 0, %s89
      %s104 = sphi 0, %s90
      %s108 = sphi 0, %s108
      %s110 = sphi 0, %s108
      %s111 = sphi 0, %s110
      %s125 = sphi 0, %s111
      %s131 = sphi 0, %s133
      %s134 = sphi 0, %s131
      %s135 = sphi 0, %s134
      %s151 = sphi 0, %s135
    $region4: #{icnn_forward.1} parent=1 // loop_header_branch
      %14 = sbr.rel (%p12) target = $region8
    $region5: #{icnn_forward.1} parent=1 // loop_body
      %s16 = ssub.s32 %s11, 1
      %s17 = ssub.s32 %s11, 2
      %s18 = sadd.s32 %s11, 1
      %s19 = ssub.s32 %s11, %s18
      %p20 = scmp.eq.s32.totalorder %s19, 0
      %s22 = sadd.s32 %s21, 1
      %s23 = scalar_select %p20, %s21, %s22
      %p26 = pneg %p20
      %p27 = scmp.eq.s32.totalorder %s11, 3
      %p28 = por %p26, %p27
      %p29 = scmp.ne.s32.totalorder %s21, %s24
      %p30 = scmp.eq.s32.totalorder %s11, 0
      %p31 = por %p29, %p30
      %p32 = scmp.ne.s32.totalorder %s21, %s24
      %p33 = scmp.eq.s32.totalorder %s16, 3
      %p34 = por %p32, %p33
      %p35 = scmp.ne.s32.totalorder %s24, %s25
      %p36 = scmp.eq.s32.totalorder %s16, 0
      %p37 = por %p35, %p36
      %p38 = scmp.ne.s32.totalorder %s24, %s25
      %p39 = scmp.eq.s32.totalorder %s17, 3
      %p40 = por %p38, %p39
      %p42 = scmp.ne.s32.totalorder %s25, %s41
      %p43 = scmp.eq.s32.totalorder %s17, 0
      %p44 = por %p42, %p43
      %s46 = sadd.s32 %s45, 1
      %p49 = scmp.eq.s32.totalorder %s11, 3
      %p50 = scmp.ne.s32.totalorder %s45, %s47
      %p51 = scmp.eq.s32.totalorder %s11, 0
      %p52 = por %p50, %p51
      %p53 = scmp.ne.s32.totalorder %s45, %s47
      %p54 = scmp.eq.s32.totalorder %s16, 3
      %p55 = por %p53, %p54
      %p56 = scmp.ne.s32.totalorder %s47, %s48
      %p57 = scmp.eq.s32.totalorder %s16, 0
      %p58 = por %p56, %p57
      %p59 = scmp.ne.s32.totalorder %s47, %s48
      %p60 = scmp.eq.s32.totalorder %s17, 3
      %p61 = por %p59, %p60
      %p63 = scmp.ne.s32.totalorder %s48, %s62
      %p64 = scmp.eq.s32.totalorder %s17, 0
      %p65 = por %p63, %p64
      %s67 = sadd.s32 %s66, 1
      %p70 = scmp.eq.s32.totalorder %s11, 3
      %p71 = scmp.ne.s32.totalorder %s66, %s68
      %p72 = scmp.eq.s32.totalorder %s11, 0
      %p73 = por %p71, %p72
      %p74 = scmp.ne.s32.totalorder %s66, %s68
      %p75 = scmp.eq.s32.totalorder %s16, 3
      %p76 = por %p74, %p75
      %p77 = scmp.ne.s32.totalorder %s68, %s69
      %p78 = scmp.eq.s32.totalorder %s16, 0
      %p79 = por %p77, %p78
      %p80 = scmp.ne.s32.totalorder %s68, %s69
      %p81 = scmp.eq.s32.totalorder %s17, 3
      %p82 = por %p80, %p81
      %p84 = scmp.ne.s32.totalorder %s69, %s83
      %p85 = scmp.eq.s32.totalorder %s17, 0
      %p86 = por %p84, %p85
      %s88 = sadd.s32 %s87, 1
      %p91 = scmp.eq.s32.totalorder %s11, 3
      %p92 = scmp.ne.s32.totalorder %s87, %s89
      %p93 = scmp.eq.s32.totalorder %s11, 0
      %p94 = por %p92, %p93
      %p95 = scmp.ne.s32.totalorder %s87, %s89
      %p96 = scmp.eq.s32.totalorder %s16, 3
      %p97 = por %p95, %p96
      %p98 = scmp.ne.s32.totalorder %s89, %s90
      %p99 = scmp.eq.s32.totalorder %s16, 0
      %p100 = por %p98, %p99
      %p101 = scmp.ne.s32.totalorder %s89, %s90
      %p102 = scmp.eq.s32.totalorder %s17, 3
      %p103 = por %p101, %p102
      %p105 = scmp.ne.s32.totalorder %s90, %s104
      %p106 = scmp.eq.s32.totalorder %s17, 0
      %p107 = por %p105, %p106
      %s109 = sadd.s32 %s108, 1
      %p112 = scmp.eq.s32.totalorder %s11, 3
      %p113 = scmp.ne.s32.totalorder %s108, %s110
      %p114 = scmp.eq.s32.totalorder %s11, 0
      %p115 = por %p113, %p114
      %p116 = scmp.ne.s32.totalorder %s108, %s110
      %p117 = scmp.eq.s32.totalorder %s16, 3
      %p118 = por %p116, %p117
      %p119 = scmp.ne.s32.totalorder %s110, %s111
      %p120 = scmp.eq.s32.totalorder %s16, 0
      %p121 = por %p119, %p120
      %p122 = scmp.ne.s32.totalorder %s110, %s111
      %p123 = scmp.eq.s32.totalorder %s17, 3
      %p124 = por %p122, %p123
      %p126 = scmp.ne.s32.totalorder %s111, %s125
      %p127 = scmp.eq.s32.totalorder %s17, 0
      %p128 = por %p126, %p127
      %s129 = ssub.s32 %s11, %s18
      %p130 = scmp.eq.s32.totalorder %s129, 0
      %s132 = sadd.s32 %s131, 1
      %s133 = scalar_select %p130, %s131, %s132
      %p136 = pneg %p130
      %p137 = scmp.eq.s32.totalorder %s11, 3
      %p138 = por %p136, %p137
      %p139 = scmp.ne.s32.totalorder %s131, %s134
      %p140 = scmp.eq.s32.totalorder %s11, 0
      %p141 = por %p139, %p140
      %p142 = scmp.ne.s32.totalorder %s131, %s134
      %p143 = scmp.eq.s32.totalorder %s16, 3
      %p144 = por %p142, %p143
      %p145 = scmp.ne.s32.totalorder %s134, %s135
      %p146 = scmp.eq.s32.totalorder %s16, 0
      %p147 = por %p145, %p146
      %p148 = scmp.ne.s32.totalorder %s134, %s135
      %p149 = scmp.eq.s32.totalorder %s17, 3
      %p150 = por %p148, %p149
      %p152 = scmp.ne.s32.totalorder %s135, %s151
      %p153 = scmp.eq.s32.totalorder %s17, 0
      %p154 = por %p152, %p153
      %p155 = scmp.le.s32.totalorder 1, %s11
      %p156 = scmp.lt.s32.totalorder %s11, 5
      %p157 = pnand %p155, %p156
      %p158 = pneg %p157
      // Predicated region
      $region9: #{icnn_forward.1} parent=5 // pred_check
        _
      $region10: #{icnn_forward.1} parent=5 // pred_check_branch
        %160 = sbr.rel (%p157) target = $region12
      $region11: #{icnn_forward.1} parent=5 // pred_region
        %s161 = ssub.s32 %s11, 1
        // Predicated region
        $region13: #{icnn_forward.1} parent=11 // pred_check
          %p162 = pneg %p58
        $region14: #{icnn_forward.1} parent=11 // pred_check_branch
          %164 = sbr.rel (%p162) target = $region16
        $region15: #{icnn_forward.1} parent=11 // pred_region
          _
        $region16: #{icnn_forward.1} parent=11 // pred_fallthru
          _
        // Predicated region
        $region17: #{icnn_forward.1} parent=11 // pred_check
          %p165 = pneg %p79
        $region18: #{icnn_forward.1} parent=11 // pred_check_branch
          %167 = sbr.rel (%p165) target = $region20
        $region19: #{icnn_forward.1} parent=11 // pred_region
          _
        $region20: #{icnn_forward.1} parent=11 // pred_fallthru
          _
        // Predicated region
        $region21: #{icnn_forward.1} parent=11 // pred_check
          %p168 = pneg %p100
        $region22: #{icnn_forward.1} parent=11 // pred_check_branch
          %170 = sbr.rel (%p168) target = $region24
        $region23: #{icnn_forward.1} parent=11 // pred_region
          _
        $region24: #{icnn_forward.1} parent=11 // pred_fallthru
          _
        // Predicated region
        $region25: #{icnn_forward.1} parent=11 // pred_check
          %p171 = pneg %p121
        $region26: #{icnn_forward.1} parent=11 // pred_check_branch
          %173 = sbr.rel (%p171) target = $region28
        $region27: #{icnn_forward.1} parent=11 // pred_region
          _
        $region28: #{icnn_forward.1} parent=11 // pred_fallthru
          _
      $region12: #{icnn_forward.1} parent=5 // pred_fallthru
        _
      %p174 = scmp.lt.s32.totalorder %s11, 4
      // Predicated region
      $region29: #{icnn_forward.1} parent=5 // pred_check
        %p175 = pneg %p174
      $region30: #{icnn_forward.1} parent=5 // pred_check_branch
        %177 = sbr.rel (%p175) target = $region32
      $region31: #{icnn_forward.1} parent=5 // pred_region
        // Predicated region
        $region33: #{icnn_forward.1} parent=31 // pred_check
          %p178 = pneg %p31
        $region34: #{icnn_forward.1} parent=31 // pred_check_branch
          %180 = sbr.rel (%p178) target = $region36
        $region35: #{icnn_forward.1} parent=31 // pred_region
          %s181 = sand.u32 %s21, 1
          %s182 = sand.u32 %s21, 1
          %s183 = smul.addr %s182, 32
          %s184 = scalar_lea.vmem [#allocation2], %s183
          %s185 = smul.u32 2, %s11
          %s186 = smul.addr %s185, 8
          %s187 = scalar_lea.vmem %s0, %s186
          // Predicated region
          $region37: #{icnn_forward.1} parent=35 // pred_check
            _
          $region38: #{icnn_forward.1} parent=35 // pred_check_branch
            %189 = sbr.rel (0) target = $region40
          $region39: #{icnn_forward.1} parent=35 // pred_region
            // Predicated region
            $region41: #{icnn_forward.1} parent=39 // pred_check
              _
            $region42: #{icnn_forward.1} parent=39 // pred_check_branch
              %191 = sbr.rel (0) target = $region44
            $region43: #{icnn_forward.1} parent=39 // pred_region
              loop: start=0, step=1, limit=1
              $region45: #{icnn_forward.1} parent=43 // loop_pre_header
                _
              $region46: #{icnn_forward.1} parent=43 // loop_header
                %s193 = sphi 0, %s197
                %p194 = scmp.ge.s32.totalorder %s193, 1
                %s198 = sphi %s187, %s187
                %s199 = sphi %s184, %s184
              $region47: #{icnn_forward.1} parent=43 // loop_header_branch
                %196 = sbr.rel (%p194) target = $region51
              $region48: #{icnn_forward.1} parent=43 // loop_body
                %v200 = vld [vmem:[%s198] sm:$0xff]
                %201 = vst [vmem:[%s199] sm:$0xff] %v200
                %v202 = vld [vmem:[%s198 + $0x8] sm:$0xff]
                %203 = vst [vmem:[%s199 + $0x8] sm:$0xff] %v202
                %v204 = vld [vmem:[%s198 + $0x40] sm:$0xff]
                %205 = vst [vmem:[%s199 + $0x10] sm:$0xff] %v204
                %v206 = vld [vmem:[%s198 + $0x48] sm:$0xff]
                %207 = vst [vmem:[%s199 + $0x18] sm:$0xff] %v206
              $region49: #{icnn_forward.1} parent=43 // loop_footer
                %s197 = sadd.s32 1, %s193
              $region50: #{icnn_forward.1} parent=43 // loop_footer_branch
                %192 = sbr.rel target = $region46
              $region51: #{icnn_forward.1} parent=43 // loop_exit
                _
            $region44: #{icnn_forward.1} parent=39 // pred_fallthru
              _
            // Predicated region
            $region52: #{icnn_forward.1} parent=39 // pred_check
              _
            $region53: #{icnn_forward.1} parent=39 // pred_check_branch
              %209 = sbr.rel target = $region55
            $region54: #{icnn_forward.1} parent=39 // pred_region
              _
            $region55: #{icnn_forward.1} parent=39 // pred_fallthru
              _
          $region40: #{icnn_forward.1} parent=35 // pred_fallthru
            _
          %210 = vnop
        $region36: #{icnn_forward.1} parent=31 // pred_fallthru
          _
      $region32: #{icnn_forward.1} parent=5 // pred_fallthru
        _
      %p211 = scmp.le.s32.totalorder 1, %s11
      %p212 = scmp.lt.s32.totalorder %s11, 5
      %p213 = pnand %p211, %p212
      %p214 = pneg %p213
      // Predicated region
      $region56: #{icnn_forward.1} parent=5 // pred_check
        _
      $region57: #{icnn_forward.1} parent=5 // pred_check_branch
        %216 = sbr.rel (%p213) target = $region59
      $region58: #{icnn_forward.1} parent=5 // pred_region
        %s217 = ssub.s32 %s11, 1
        %s218 = sand.u32 %s24, 1
        %s219 = sand.u32 %s24, 1
        %s220 = smul.addr %s219, 32
        %s221 = scalar_lea.vmem [#allocation2], %s220
        // Predicated region
        $region60: #{icnn_forward.1} parent=58 // pred_check
          %p222 = pneg %p37
        $region61: #{icnn_forward.1} parent=58 // pred_check_branch
          %224 = sbr.rel (%p222) target = $region63
        $region62: #{icnn_forward.1} parent=58 // pred_region
          _
        $region63: #{icnn_forward.1} parent=58 // pred_fallthru
          _
        %s225 = sand.u32 %s24, 1
        %s226 = sand.u32 %s24, 1
        %s227 = smul.addr %s226, 32
        %s228 = scalar_lea.vmem [#allocation2], %s227
        %p229 = pneg %p37
        %p230 = pneg %p34
        %p231 = pneg %p58
        %p232 = pneg %p55
        %p233 = pneg %p79
        %p234 = pneg %p76
        %p235 = pneg %p100
        %p236 = pneg %p97
        %p237 = pneg %p121
        %p238 = pneg %p118
        %p239 = pneg %p147
        %p240 = pneg %p144
        %s241 = smul.u32 2, %s16
        %p242 = scmp.lt.s32.totalorder %s241, 7
        %s243 = scalar_select %p242, %s241, 7
        %s244 = scalar_lea.vmem %s5, %s243
        %s245 = smul.u32 2, %s16
        %s246 = smul.u32 2, %s16
        %p247 = scmp.lt.s32.totalorder %s246, 7
        %s248 = scalar_select %p247, %s246, 7
        %s249 = scalar_lea.vmem %s5, %s248
        %s250 = smul.u32 2, %s16
        %v251 = vld [vmem:[%s221] sm:$0xff]
        %v252 = vld [vmem:[%s221 + $0x8] sm:$0xff]
        %v253 = vld [vmem:[%s221 + $0x10] sm:$0xff]
        %v254 = vld [vmem:[%s221 + $0x18] sm:$0xff]
        %v255 = vld [vmem:[%s1] sm:$0xff]
        %v256 = vld [vmem:[%s1 + $0x8] sm:$0xff]
        %v257 = vld [vmem:[%s1 + $0x10] sm:$0xff]
        %v258 = vld [vmem:[%s1 + $0x18] sm:$0xff]
        %v259 = vld [vmem:[%s1 + $0x20] sm:$0xff]
        %v260 = vld [vmem:[%s1 + $0x28] sm:$0xff]
        %v261 = vld [vmem:[%s1 + $0x30] sm:$0xff]
        %v262 = vld [vmem:[%s1 + $0x38] sm:$0xff]
        %v263 = vld [vmem:[%s1 + $0x40] sm:$0xff]
        %v264 = vld [vmem:[%s1 + $0x48] sm:$0xff]
        %v265 = vld [vmem:[%s1 + $0x50] sm:$0xff]
        %v266 = vld [vmem:[%s1 + $0x58] sm:$0xff]
        %v267 = vld [vmem:[%s1 + $0x60] sm:$0xff]
        %v268 = vld [vmem:[%s1 + $0x68] sm:$0xff]
        %v269 = vld [vmem:[%s1 + $0x70] sm:$0xff]
        %v270 = vld [vmem:[%s1 + $0x78] sm:$0xff]
        %v271 = vld [vmem:[%s1 + $0x80] sm:$0x1]
        %v272 = vld [vmem:[%s2] sm:$0xff]
        %v273 = vld [vmem:[%s2 + $0x8] sm:$0xff]
        %v274 = vld [vmem:[%s2 + $0x10] sm:$0xff]
        %v275 = vld [vmem:[%s2 + $0x18] sm:$0xff]
        %v276 = vld [vmem:[%s2 + $0x20] sm:$0xff]
        %v277 = vld [vmem:[%s2 + $0x28] sm:$0xff]
        %v278 = vld [vmem:[%s2 + $0x30] sm:$0xff]
        %v279 = vld [vmem:[%s2 + $0x38] sm:$0xff]
        %v280 = vld [vmem:[%s2 + $0x40] sm:$0xff]
        %v281 = vld [vmem:[%s2 + $0x48] sm:$0xff]
        %v282 = vld [vmem:[%s2 + $0x50] sm:$0xff]
        %v283 = vld [vmem:[%s2 + $0x58] sm:$0xff]
        %v284 = vld [vmem:[%s2 + $0x60] sm:$0xff]
        %v285 = vld [vmem:[%s2 + $0x68] sm:$0xff]
        %v286 = vld [vmem:[%s2 + $0x70] sm:$0xff]
        %v287 = vld [vmem:[%s2 + $0x78] sm:$0xff]
        %v288 = vld [vmem:[%s2 + $0x80] sm:$0x1]
        %290 = vset.pattern.permute.xlu0 0
        %291 = vperm.xlu0 %290, %v272
        %v292 = vpop.permute.xlu0 %291
        %295 = vset.pattern.permute.xlu0 0
        %296 = vperm.xlu0 %295, %v273
        %v297 = vpop.permute.xlu0 %296
        %300 = vset.pattern.permute.xlu0 0
        %301 = vperm.xlu0 %300, %v274
        %v302 = vpop.permute.xlu0 %301
        %305 = vset.pattern.permute.xlu0 0
        %306 = vperm.xlu0 %305, %v275
        %v307 = vpop.permute.xlu0 %306
        %310 = vset.pattern.permute.xlu0 0
        %311 = vperm.xlu0 %310, %v276
        %v312 = vpop.permute.xlu0 %311
        %315 = vset.pattern.permute.xlu0 0
        %316 = vperm.xlu0 %315, %v277
        %v317 = vpop.permute.xlu0 %316
        %320 = vset.pattern.permute.xlu0 0
        %321 = vperm.xlu0 %320, %v278
        %v322 = vpop.permute.xlu0 %321
        %325 = vset.pattern.permute.xlu0 0
        %326 = vperm.xlu0 %325, %v279
        %v327 = vpop.permute.xlu0 %326
        %330 = vset.pattern.permute.xlu0 0
        %331 = vperm.xlu0 %330, %v280
        %v332 = vpop.permute.xlu0 %331
        %335 = vset.pattern.permute.xlu0 0
        %336 = vperm.xlu0 %335, %v281
        %v337 = vpop.permute.xlu0 %336
        %340 = vset.pattern.permute.xlu0 0
        %341 = vperm.xlu0 %340, %v282
        %v342 = vpop.permute.xlu0 %341
        %345 = vset.pattern.permute.xlu0 0
        %346 = vperm.xlu0 %345, %v283
        %v347 = vpop.permute.xlu0 %346
        %350 = vset.pattern.permute.xlu0 0
        %351 = vperm.xlu0 %350, %v284
        %v352 = vpop.permute.xlu0 %351
        %355 = vset.pattern.permute.xlu0 0
        %356 = vperm.xlu0 %355, %v285
        %v357 = vpop.permute.xlu0 %356
        %360 = vset.pattern.permute.xlu0 0
        %361 = vperm.xlu0 %360, %v286
        %v362 = vpop.permute.xlu0 %361
        %365 = vset.pattern.permute.xlu0 0
        %366 = vperm.xlu0 %365, %v287
        %v367 = vpop.permute.xlu0 %366
        %370 = vset.pattern.permute.xlu0 0
        %371 = vperm.xlu0 %370, %v288
        %v372 = vpop.permute.xlu0 %371
        %vm374 = vcmask 130048
        %v376 = vsel %vm374, %v255, 0
        %v379 = vsel %vm374, %v256, 0
        %v382 = vsel %vm374, %v257, 0
        %v385 = vsel %vm374, %v258, 0
        %v388 = vsel %vm374, %v259, 0
        %v391 = vsel %vm374, %v260, 0
        %v394 = vsel %vm374, %v261, 0
        %v397 = vsel %vm374, %v262, 0
        %v400 = vsel %vm374, %v263, 0
        %v403 = vsel %vm374, %v264, 0
        %v406 = vsel %vm374, %v265, 0
        %v409 = vsel %vm374, %v266, 0
        %v412 = vsel %vm374, %v267, 0
        %v415 = vsel %vm374, %v268, 0
        %v418 = vsel %vm374, %v269, 0
        %v421 = vsel %vm374, %v270, 0
        %v424 = vsel %vm374, %v271, 0
        %426 = vmatprep.subr.mxu0 %v252
        %427 = vmatpush1.msra.mxu0 %v251
        %428 = vmatprep.subr.mxu0 %v254
        %429 = vmatpush1.msra.mxu0 %v253
        %430 = vmatprep.subr.mxu0 0.0
        %431 = vmatpush1.msra.mxu0 0.0
        %432 = vmatprep.subr.mxu0 0.0
        %433 = vmatpush1.msra.mxu0 0.0
        %434 = vmatprep.subr.mxu0 0.0
        %435 = vmatpush1.msra.mxu0 0.0
        %436 = vmatprep.subr.mxu0 0.0
        %437 = vmatpush1.msra.mxu0 0.0
        %438 = vmatprep.subr.mxu0 0.0
        %439 = vmatpush1.msra.mxu0 0.0
        %440 = vmatprep.subr.mxu0 0.0
        %441 = vmatpush1.msra.mxu0 0.0
        %442 = vmatprep.subr.mxu0 0.0
        %443 = vmatpush1.msra.mxu0 0.0
        %444 = vmatprep.subr.mxu0 0.0
        %445 = vmatpush1.msra.mxu0 0.0
        %446 = vmatprep.subr.mxu0 0.0
        %447 = vmatpush1.msra.mxu0 0.0
        %448 = vmatprep.subr.mxu0 0.0
        %449 = vmatpush1.msra.mxu0 0.0
        %450 = vmatprep.subr.mxu0 0.0
        %451 = vmatpush1.msra.mxu0 0.0
        %452 = vmatprep.subr.mxu0 0.0
        %453 = vmatpush1.msra.mxu0 0.0
        %454 = vmatprep.subr.mxu0 0.0
        %455 = vmatpush1.msra.mxu0 0.0
        %456 = vmatprep.subr.mxu0 0.0
        %457 = vmatpush1.msra.mxu0 0.0
        %458 = vmatprep.subr.mxu0 0.0
        %459 = vmatpush1.msra.mxu0 0.0
        %460 = vmatprep.subr.mxu0 0.0
        %461 = vmatpush1.msra.mxu0 0.0
        %462 = vmatprep.subr.mxu0 0.0
        %463 = vmatpush1.msra.mxu0 0.0
        %464 = vmatprep.subr.mxu0 0.0
        %465 = vmatpush1.msra.mxu0 0.0
        %466 = vmatprep.subr.mxu0 0.0
        %467 = vmatpush1.msra.mxu0 0.0
        %468 = vmatprep.subr.mxu0 0.0
        %469 = vmatpush1.msra.mxu0 0.0
        %470 = vmatprep.subr.mxu0 0.0
        %471 = vmatpush1.msra.mxu0 0.0
        %472 = vmatprep.subr.mxu0 0.0
        %473 = vmatpush1.msra.mxu0 0.0
        %474 = vmatprep.subr.mxu0 0.0
        %475 = vmatpush1.msra.mxu0 0.0
        %476 = vmatprep.subr.mxu0 0.0
        %477 = vmatpush1.msra.mxu0 0.0
        %478 = vmatprep.subr.mxu0 0.0
        %479 = vmatpush1.msra.mxu0 0.0
        %480 = vmatprep.subr.mxu0 0.0
        %481 = vmatpush1.msra.mxu0 0.0
        %482 = vmatprep.subr.mxu0 0.0
        %483 = vmatpush1.msra.mxu0 0.0
        %484 = vmatprep.subr.mxu0 0.0
        %485 = vmatpush1.msra.mxu0 0.0
        %486 = vmatprep.subr.mxu0 0.0
        %487 = vmatpush1.msra.mxu0 0.0
        %488 = vmatprep.subr.mxu0 0.0
        %489 = vmatpush1.msra.mxu0 0.0
        %490 = vmatprep.mubr.f32.mxu0 0.0
        %491 = vmatmul.mubr.f32.gmra.mrb[0].mxu0 %v376
        %v492 = vpop.f32.mrb[0].mxu0
        %v493 = vadd.f32 %v292, %v492
        %v494 = vpop.f32.mrb[0].mxu0
        %v495 = vadd.f32 %v292, %v494
        %496 = vmatprep.mubr.f32.mxu0 0.0
        %497 = vmatmul.mubr.f32.gmra.mrb[0].mxu0 %v379
        %v498 = vpop.f32.mrb[0].mxu0
        %v499 = vadd.f32 %v297, %v498
        %v500 = vpop.f32.mrb[0].mxu0
        %v501 = vadd.f32 %v297, %v500
        %502 = vmatprep.mubr.f32.mxu0 0.0
        %503 = vmatmul.mubr.f32.gmra.mrb[0].mxu0 %v382
        %v504 = vpop.f32.mrb[0].mxu0
        %v505 = vadd.f32 %v302, %v504
        %v506 = vpop.f32.mrb[0].mxu0
        %v507 = vadd.f32 %v302, %v506
        %508 = vmatprep.mubr.f32.mxu0 0.0
        %509 = vmatmul.mubr.f32.gmra.mrb[0].mxu0 %v385
        %v510 = vpop.f32.mrb[0].mxu0
        %v511 = vadd.f32 %v307, %v510
        %v512 = vpop.f32.mrb[0].mxu0
        %v513 = vadd.f32 %v307, %v512
        %514 = vmatprep.mubr.f32.mxu0 0.0
        %515 = vmatmul.mubr.f32.gmra.mrb[0].mxu0 %v388
        %v516 = vpop.f32.mrb[0].mxu0
        %v517 = vadd.f32 %v312, %v516
        %v518 = vpop.f32.mrb[0].mxu0
        %v519 = vadd.f32 %v312, %v518
        %520 = vmatprep.mubr.f32.mxu0 0.0
        %521 = vmatmul.mubr.f32.gmra.mrb[0].mxu0 %v391
        %v522 = vpop.f32.mrb[0].mxu0
        %v523 = vadd.f32 %v317, %v522
        %v524 = vpop.f32.mrb[0].mxu0
        %v525 = vadd.f32 %v317, %v524
        %526 = vmatprep.mubr.f32.mxu0 0.0
        %527 = vmatmul.mubr.f32.gmra.mrb[0].mxu0 %v394
        %v528 = vpop.f32.mrb[0].mxu0
        %v529 = vadd.f32 %v322, %v528
        %v530 = vpop.f32.mrb[0].mxu0
        %v531 = vadd.f32 %v322, %v530
        %532 = vmatprep.mubr.f32.mxu0 0.0
        %533 = vmatmul.mubr.f32.gmra.mrb[0].mxu0 %v397
        %v534 = vpop.f32.mrb[0].mxu0
        %v535 = vadd.f32 %v327, %v534
        %v536 = vpop.f32.mrb[0].mxu0
        %v537 = vadd.f32 %v327, %v536
        %538 = vmatprep.mubr.f32.mxu0 0.0
        %539 = vmatmul.mubr.f32.gmra.mrb[0].mxu0 %v400
        %v540 = vpop.f32.mrb[0].mxu0
        %v541 = vadd.f32 %v332, %v540
        %v542 = vpop.f32.mrb[0].mxu0
        %v543 = vadd.f32 %v332, %v542
        %544 = vmatprep.mubr.f32.mxu0 0.0
        %545 = vmatmul.mubr.f32.gmra.mrb[0].mxu0 %v403
        %v546 = vpop.f32.mrb[0].mxu0
        %v547 = vadd.f32 %v337, %v546
        %v548 = vpop.f32.mrb[0].mxu0
        %v549 = vadd.f32 %v337, %v548
        %550 = vmatprep.mubr.f32.mxu0 0.0
        %551 = vmatmul.mubr.f32.gmra.mrb[0].mxu0 %v406
        %v552 = vpop.f32.mrb[0].mxu0
        %v553 = vadd.f32 %v342, %v552
        %v554 = vpop.f32.mrb[0].mxu0
        %v555 = vadd.f32 %v342, %v554
        %556 = vmatprep.mubr.f32.mxu0 0.0
        %557 = vmatmul.mubr.f32.gmra.mrb[0].mxu0 %v409
        %v558 = vpop.f32.mrb[0].mxu0
        %v559 = vadd.f32 %v347, %v558
        %v560 = vpop.f32.mrb[0].mxu0
        %v561 = vadd.f32 %v347, %v560
        %562 = vmatprep.mubr.f32.mxu0 0.0
        %563 = vmatmul.mubr.f32.gmra.mrb[0].mxu0 %v412
        %v564 = vpop.f32.mrb[0].mxu0
        %v565 = vadd.f32 %v352, %v564
        %v566 = vpop.f32.mrb[0].mxu0
        %v567 = vadd.f32 %v352, %v566
        %568 = vmatprep.mubr.f32.mxu0 0.0
        %569 = vmatmul.mubr.f32.gmra.mrb[0].mxu0 %v415
        %v570 = vpop.f32.mrb[0].mxu0
        %v571 = vadd.f32 %v357, %v570
        %v572 = vpop.f32.mrb[0].mxu0
        %v573 = vadd.f32 %v357, %v572
        %574 = vmatprep.mubr.f32.mxu0 0.0
        %575 = vmatmul.mubr.f32.gmra.mrb[0].mxu0 %v418
        %v576 = vpop.f32.mrb[0].mxu0
        %v577 = vadd.f32 %v362, %v576
        %v578 = vpop.f32.mrb[0].mxu0
        %v579 = vadd.f32 %v362, %v578
        %580 = vmatprep.mubr.f32.mxu0 0.0
        %581 = vmatmul.mubr.f32.gmra.mrb[0].mxu0 %v421
        %v582 = vpop.f32.mrb[0].mxu0
        %v583 = vadd.f32 %v367, %v582
        %v584 = vpop.f32.mrb[0].mxu0
        %v585 = vadd.f32 %v367, %v584
        %586 = vmatprep.mubr.f32.mxu0 0.0
        %587 = vmatmul.mubr.f32.gmra.mrb[0].mxu0 %v424
        %v588 = vpop.f32.mrb[0].mxu0
        %v589 = vadd.f32 %v372, %v588
        %v590 = vpop.f32.mrb[0].mxu0
        %v591 = vadd.f32 %v372, %v590
        %592 = vdwg.mxu0
        %v593 = vmax.f32 %v493, 0.0
        %v594 = vmax.f32 %v495, 0.0
        %v595 = vmax.f32 %v499, 0.0
        %v596 = vmax.f32 %v501, 0.0
        %v597 = vmax.f32 %v505, 0.0
        %v598 = vmax.f32 %v507, 0.0
        %v599 = vmax.f32 %v511, 0.0
        %v600 = vmax.f32 %v513, 0.0
        %v601 = vmax.f32 %v517, 0.0
        %v602 = vmax.f32 %v519, 0.0
        %v603 = vmax.f32 %v523, 0.0
        %v604 = vmax.f32 %v525, 0.0
        %v605 = vmax.f32 %v529, 0.0
        %v606 = vmax.f32 %v531, 0.0
        %v607 = vmax.f32 %v535, 0.0
        %v608 = vmax.f32 %v537, 0.0
        %v609 = vld [vmem:[%s3] sm:$0xff]
        %v610 = vld [vmem:[%s3 + $0x8] sm:$0xff]
        %v611 = vld [vmem:[%s3 + $0x10] sm:$0xff]
        %v612 = vld [vmem:[%s3 + $0x18] sm:$0xff]
        %v613 = vld [vmem:[%s3 + $0x20] sm:$0xff]
        %v614 = vld [vmem:[%s3 + $0x28] sm:$0xff]
        %v615 = vld [vmem:[%s3 + $0x30] sm:$0xff]
        %v616 = vld [vmem:[%s3 + $0x38] sm:$0xff]
        %vm617 = vcmask 523264
        %v619 = vsel %vm617, %v609, 0
        %v622 = vsel %vm617, %v610, 0
        %v625 = vsel %vm617, %v611, 0
        %v628 = vsel %vm617, %v612, 0
        %v631 = vsel %vm617, %v613, 0
        %v634 = vsel %vm617, %v614, 0
        %v637 = vsel %vm617, %v615, 0
        %v640 = vsel %vm617, %v616, 0
        %642 = vmatprep.subr.mxu0 %v594
        %643 = vmatpush1.msra.mxu0 %v593
        %644 = vmatprep.subr.mxu0 %v596
        %645 = vmatpush1.msra.mxu0 %v595
        %646 = vmatprep.subr.mxu0 %v598
        %647 = vmatpush1.msra.mxu0 %v597
        %648 = vmatprep.subr.mxu0 %v600
        %649 = vmatpush1.msra.mxu0 %v599
        %650 = vmatprep.subr.mxu0 %v602
        %651 = vmatpush1.msra.mxu0 %v601
        %652 = vmatprep.subr.mxu0 %v604
        %653 = vmatpush1.msra.mxu0 %v603
        %654 = vmatprep.subr.mxu0 %v606
        %655 = vmatpush1.msra.mxu0 %v605
        %656 = vmatprep.subr.mxu0 %v608
        %657 = vmatpush1.msra.mxu0 %v607
        %658 = vmatprep.subr.mxu0 0.0
        %659 = vmatpush1.msra.mxu0 0.0
        %660 = vmatprep.subr.mxu0 0.0
        %661 = vmatpush1.msra.mxu0 0.0
        %662 = vmatprep.subr.mxu0 0.0
        %663 = vmatpush1.msra.mxu0 0.0
        %664 = vmatprep.subr.mxu0 0.0
        %665 = vmatpush1.msra.mxu0 0.0
        %666 = vmatprep.subr.mxu0 0.0
        %667 = vmatpush1.msra.mxu0 0.0
        %668 = vmatprep.subr.mxu0 0.0
        %669 = vmatpush1.msra.mxu0 0.0
        %670 = vmatprep.subr.mxu0 0.0
        %671 = vmatpush1.msra.mxu0 0.0
        %672 = vmatprep.subr.mxu0 0.0
        %673 = vmatpush1.msra.mxu0 0.0
        %674 = vmatprep.subr.mxu0 0.0
        %675 = vmatpush1.msra.mxu0 0.0
        %676 = vmatprep.subr.mxu0 0.0
        %677 = vmatpush1.msra.mxu0 0.0
        %678 = vmatprep.subr.mxu0 0.0
        %679 = vmatpush1.msra.mxu0 0.0
        %680 = vmatprep.subr.mxu0 0.0
        %681 = vmatpush1.msra.mxu0 0.0
        %682 = vmatprep.subr.mxu0 0.0
        %683 = vmatpush1.msra.mxu0 0.0
        %684 = vmatprep.subr.mxu0 0.0
        %685 = vmatpush1.msra.mxu0 0.0
        %686 = vmatprep.subr.mxu0 0.0
        %687 = vmatpush1.msra.mxu0 0.0
        %688 = vmatprep.subr.mxu0 0.0
        %689 = vmatpush1.msra.mxu0 0.0
        %690 = vmatprep.subr.mxu0 0.0
        %691 = vmatpush1.msra.mxu0 0.0
        %692 = vmatprep.subr.mxu0 0.0
        %693 = vmatpush1.msra.mxu0 0.0
        %694 = vmatprep.subr.mxu0 0.0
        %695 = vmatpush1.msra.mxu0 0.0
        %696 = vmatprep.subr.mxu0 0.0
        %697 = vmatpush1.msra.mxu0 0.0
        %698 = vmatprep.subr.mxu0 0.0
        %699 = vmatpush1.msra.mxu0 0.0
        %700 = vmatprep.subr.mxu0 0.0
        %701 = vmatpush1.msra.mxu0 0.0
        %702 = vmatprep.subr.mxu0 0.0
        %703 = vmatpush1.msra.mxu0 0.0
        %704 = vmatprep.subr.mxu0 0.0
        %705 = vmatpush1.msra.mxu0 0.0
        %706 = vmatprep.mubr.f32.mxu0 0.0
        %707 = vmatmul.mubr.f32.gmra.mrb[0].mxu0 %v619
        %v708 = vpop.f32.mrb[0].mxu0
        %v709 = vadd.f32 0.0, %v708
        %v710 = vpop.f32.mrb[0].mxu0
        %v711 = vadd.f32 0.0, %v710
        %712 = vmatprep.mubr.f32.mxu0 0.0
        %713 = vmatmul.mubr.f32.gmra.mrb[0].mxu0 %v622
        %v714 = vpop.f32.mrb[0].mxu0
        %v715 = vadd.f32 0.0, %v714
        %v716 = vpop.f32.mrb[0].mxu0
        %v717 = vadd.f32 0.0, %v716
        %718 = vmatprep.mubr.f32.mxu0 0.0
        %719 = vmatmul.mubr.f32.gmra.mrb[0].mxu0 %v625
        %v720 = vpop.f32.mrb[0].mxu0
        %v721 = vadd.f32 0.0, %v720
        %v722 = vpop.f32.mrb[0].mxu0
        %v723 = vadd.f32 0.0, %v722
        %724 = vmatprep.mubr.f32.mxu0 0.0
        %725 = vmatmul.mubr.f32.gmra.mrb[0].mxu0 %v628
        %v726 = vpop.f32.mrb[0].mxu0
        %v727 = vadd.f32 0.0, %v726
        %v728 = vpop.f32.mrb[0].mxu0
        %v729 = vadd.f32 0.0, %v728
        %730 = vmatprep.mubr.f32.mxu0 0.0
        %731 = vmatmul.mubr.f32.gmra.mrb[0].mxu0 %v631
        %v732 = vpop.f32.mrb[0].mxu0
        %v733 = vadd.f32 0.0, %v732
        %v734 = vpop.f32.mrb[0].mxu0
        %v735 = vadd.f32 0.0, %v734
        %736 = vmatprep.mubr.f32.mxu0 0.0
        %737 = vmatmul.mubr.f32.gmra.mrb[0].mxu0 %v634
        %v738 = vpop.f32.mrb[0].mxu0
        %v739 = vadd.f32 0.0, %v738
        %v740 = vpop.f32.mrb[0].mxu0
        %v741 = vadd.f32 0.0, %v740
        %742 = vmatprep.mubr.f32.mxu0 0.0
        %743 = vmatmul.mubr.f32.gmra.mrb[0].mxu0 %v637
        %v744 = vpop.f32.mrb[0].mxu0
        %v745 = vadd.f32 0.0, %v744
        %v746 = vpop.f32.mrb[0].mxu0
        %v747 = vadd.f32 0.0, %v746
        %748 = vmatprep.mubr.f32.mxu0 0.0
        %749 = vmatmul.mubr.f32.gmra.mrb[0].mxu0 %v640
        %v750 = vpop.f32.mrb[0].mxu0
        %v751 = vadd.f32 0.0, %v750
        %v752 = vpop.f32.mrb[0].mxu0
        %v753 = vadd.f32 0.0, %v752
        %754 = vdwg.mxu0
        %v755 = vadd.f32 %v541, %v709
        %v756 = vadd.f32 %v543, %v711
        %v757 = vadd.f32 %v547, %v715
        %v758 = vadd.f32 %v549, %v717
        %v759 = vadd.f32 %v553, %v721
        %v760 = vadd.f32 %v555, %v723
        %v761 = vadd.f32 %v559, %v727
        %v762 = vadd.f32 %v561, %v729
        %v763 = vadd.f32 %v565, %v733
        %v764 = vadd.f32 %v567, %v735
        %v765 = vadd.f32 %v571, %v739
        %v766 = vadd.f32 %v573, %v741
        %v767 = vadd.f32 %v577, %v745
        %v768 = vadd.f32 %v579, %v747
        %v769 = vadd.f32 %v583, %v751
        %v770 = vadd.f32 %v585, %v753
        %v771 = vmax.f32 %v755, 0.0
        %v772 = vmax.f32 %v756, 0.0
        %v773 = vmax.f32 %v757, 0.0
        %v774 = vmax.f32 %v758, 0.0
        %v775 = vmax.f32 %v759, 0.0
        %v776 = vmax.f32 %v760, 0.0
        %v777 = vmax.f32 %v761, 0.0
        %v778 = vmax.f32 %v762, 0.0
        %v779 = vmax.f32 %v763, 0.0
        %v780 = vmax.f32 %v764, 0.0
        %v781 = vmax.f32 %v765, 0.0
        %v782 = vmax.f32 %v766, 0.0
        %v783 = vmax.f32 %v767, 0.0
        %v784 = vmax.f32 %v768, 0.0
        %v785 = vmax.f32 %v769, 0.0
        %v786 = vmax.f32 %v770, 0.0
        %v787 = vld [vmem:[%s4] sm:$0x1]
        %v789 = vsel %vm617, %v787, 0
        %791 = vmatprep.subr.mxu0 %v772
        %792 = vmatpush1.msra.mxu0 %v771
        %793 = vmatprep.subr.mxu0 %v774
        %794 = vmatpush1.msra.mxu0 %v773
        %795 = vmatprep.subr.mxu0 %v776
        %796 = vmatpush1.msra.mxu0 %v775
        %797 = vmatprep.subr.mxu0 %v778
        %798 = vmatpush1.msra.mxu0 %v777
        %799 = vmatprep.subr.mxu0 %v780
        %800 = vmatpush1.msra.mxu0 %v779
        %801 = vmatprep.subr.mxu0 %v782
        %802 = vmatpush1.msra.mxu0 %v781
        %803 = vmatprep.subr.mxu0 %v784
        %804 = vmatpush1.msra.mxu0 %v783
        %805 = vmatprep.subr.mxu0 %v786
        %806 = vmatpush1.msra.mxu0 %v785
        %807 = vmatprep.subr.mxu0 0.0
        %808 = vmatpush1.msra.mxu0 0.0
        %809 = vmatprep.subr.mxu0 0.0
        %810 = vmatpush1.msra.mxu0 0.0
        %811 = vmatprep.subr.mxu0 0.0
        %812 = vmatpush1.msra.mxu0 0.0
        %813 = vmatprep.subr.mxu0 0.0
        %814 = vmatpush1.msra.mxu0 0.0
        %815 = vmatprep.subr.mxu0 0.0
        %816 = vmatpush1.msra.mxu0 0.0
        %817 = vmatprep.subr.mxu0 0.0
        %818 = vmatpush1.msra.mxu0 0.0
        %819 = vmatprep.subr.mxu0 0.0
        %820 = vmatpush1.msra.mxu0 0.0
        %821 = vmatprep.subr.mxu0 0.0
        %822 = vmatpush1.msra.mxu0 0.0
        %823 = vmatprep.subr.mxu0 0.0
        %824 = vmatpush1.msra.mxu0 0.0
        %825 = vmatprep.subr.mxu0 0.0
        %826 = vmatpush1.msra.mxu0 0.0
        %827 = vmatprep.subr.mxu0 0.0
        %828 = vmatpush1.msra.mxu0 0.0
        %829 = vmatprep.subr.mxu0 0.0
        %830 = vmatpush1.msra.mxu0 0.0
        %831 = vmatprep.subr.mxu0 0.0
        %832 = vmatpush1.msra.mxu0 0.0
        %833 = vmatprep.subr.mxu0 0.0
        %834 = vmatpush1.msra.mxu0 0.0
        %835 = vmatprep.subr.mxu0 0.0
        %836 = vmatpush1.msra.mxu0 0.0
        %837 = vmatprep.subr.mxu0 0.0
        %838 = vmatpush1.msra.mxu0 0.0
        %839 = vmatprep.subr.mxu0 0.0
        %840 = vmatpush1.msra.mxu0 0.0
        %841 = vmatprep.subr.mxu0 0.0
        %842 = vmatpush1.msra.mxu0 0.0
        %843 = vmatprep.subr.mxu0 0.0
        %844 = vmatpush1.msra.mxu0 0.0
        %845 = vmatprep.subr.mxu0 0.0
        %846 = vmatpush1.msra.mxu0 0.0
        %847 = vmatprep.subr.mxu0 0.0
        %848 = vmatpush1.msra.mxu0 0.0
        %849 = vmatprep.subr.mxu0 0.0
        %850 = vmatpush1.msra.mxu0 0.0
        %851 = vmatprep.subr.mxu0 0.0
        %852 = vmatpush1.msra.mxu0 0.0
        %853 = vmatprep.subr.mxu0 0.0
        %854 = vmatpush1.msra.mxu0 0.0
        %855 = vmatprep.mubr.f32.mxu0 0.0
        %856 = vmatmul.mubr.f32.gmra.mrb[0].mxu0 %v789
        %v857 = vpop.f32.mrb[0].mxu0
        %v858 = vadd.f32 0.0, %v857
        %v859 = vpop.f32.mrb[0].mxu0
        %v860 = vadd.f32 0.0, %v859
        %861 = vdwg.mxu0
        %v862 = vadd.f32 %v589, %v858
        %v863 = vadd.f32 %v591, %v860
        %v866 = vcombine.low %v862, %v863
        %v868 = vunpack.c.l.s4 1966171168
        %v869 = vunpack.c.0.s8 %v868
        %v870 = vlaneseq
        %v871 = vshrl.u32 %v870, 7
        %v872 = vsub.s32 %v869, %v871
        %v873 = vrot.slane %v866, %v872
        %v875 = vunpack.c.l.s4 1966171168
        %v876 = vunpack.c.0.s8 %v875
        %v877 = vlaneseq
        %v878 = vshrl.u32 %v877, 7
        %v879 = vsub.s32 %v876, %v878
        %v880 = vrot.slane %v873, %v879
        %v882 = vlaneseq
        %vm883 = vcmp.ge.s32.totalorder %v882, 0
        %vm884 = vcmp.lt.s32.totalorder %v882, 256
        %vm885 = vmand %vm883, %vm884
        %886 = vst.msk [vmem:[%s249] sm:$0x3] %vm885, %v880
        %s887 = smul.u32 2, %s16
        %p888 = scmp.lt.s32.totalorder %s887, 7
        %s889 = scalar_select %p888, %s887, 7
        %s890 = scalar_lea.vmem %s5, %s889
        // Predicated region
        $region64: #{icnn_forward.1} parent=58 // pred_check
          %p891 = pneg %p144
        $region65: #{icnn_forward.1} parent=58 // pred_check_branch
          %893 = sbr.rel (%p891) target = $region67
        $region66: #{icnn_forward.1} parent=58 // pred_region
          %s894 = smul.u32 2, %s16
        $region67: #{icnn_forward.1} parent=58 // pred_fallthru
          _
      $region59: #{icnn_forward.1} parent=5 // pred_fallthru
        _
      %p895 = scmp.le.s32.totalorder 2, %s11
      // Predicated region
      $region68: #{icnn_forward.1} parent=5 // pred_check
        %p896 = pneg %p895
      $region69: #{icnn_forward.1} parent=5 // pred_check_branch
        %898 = sbr.rel (%p896) target = $region71
      $region70: #{icnn_forward.1} parent=5 // pred_region
        %s899 = ssub.s32 %s11, 2
        // Predicated region
        $region72: #{icnn_forward.1} parent=70 // pred_check
          %p900 = pneg %p150
        $region73: #{icnn_forward.1} parent=70 // pred_check_branch
          %902 = sbr.rel (%p900) target = $region75
        $region74: #{icnn_forward.1} parent=70 // pred_region
          %s903 = smul.u32 2, %s17
          %p904 = scmp.lt.s32.totalorder %s903, 7
          %s905 = scalar_select %p904, %s903, 7
          %s906 = scalar_lea.vmem %s5, %s905
        $region75: #{icnn_forward.1} parent=70 // pred_fallthru
          _
      $region71: #{icnn_forward.1} parent=5 // pred_fallthru
        _
    $region6: #{icnn_forward.1} parent=1 // loop_footer
      %s15 = sadd.s32 1, %s11
    $region7: #{icnn_forward.1} parent=1 // loop_footer_branch
      %10 = sbr.rel target = $region3
    $region8: #{icnn_forward.1} parent=1 // loop_exit
      _

</llo_original>
